<compile_context>
chip_gen: v5e
topology: v5e:2x2
jax: 0.10.0
libtpu: 0.0.40
codegen_flags: <defaults>
</compile_context>

<pallas_src>
import functools

import jax
import jax.numpy as jnp
from jax import lax
from jax.experimental import pallas as pl
from jax.experimental.pallas import tpu as pltpu

BN_EPS = 1e-5
LANE = 128
VMEM_BUDGET_BYTES = 48 << 20   # v7x-safe working-set cap (64 MiB physical VMEM)


# --------------------------------------------------------------------------- kernels
def _conv_stats_kernel(patches_ref, w_ref, y_ref, sum_ref, sumsq_ref):
    """Per row tile: y = patches @ w (MXU, f32 acc), plus per-tile BN partial sums."""
    # patches_ref: (TILE_R, F) bf16     row tile of im2col patches
    # w_ref:       (F, Cpad)   bf16     resident weight
    # y_ref:       (TILE_R, Cpad)       un-normalized conv output (intermediate)
    # sum_ref/sumsq_ref: (1, 1, Cpad) f32  per-tile partial sums (reduced by XLA later)
    y = jnp.dot(patches_ref[...], w_ref[...], preferred_element_type=jnp.float32)
    y_ref[...] = y.astype(y_ref.dtype)
    s = jnp.sum(y, axis=0, keepdims=True)        # (1, Cpad)
    sq = jnp.sum(y * y, axis=0, keepdims=True)   # (1, Cpad)
    sum_ref[...] = s[None]
    sumsq_ref[...] = sq[None]


def _bn_relu_kernel(y_ref, scale_ref, shift_ref, out_ref):
    """Per row tile: out = relu(y * scale + shift) with precomputed global BN stats."""
    y = y_ref[...].astype(jnp.float32)
    out_ref[...] = jnp.maximum(y * scale_ref[...] + shift_ref[...], 0.0).astype(out_ref.dtype)


# --------------------------------------------------------------------------- helpers
def _im2col_nchw(x, kh, kw):
    """x: (N, Cin, H, W) -> patches (N*H*W, Cin*kh*kw), stride=1, padding=k//2.

    Feature index = cin*kh*kw + dkh*kw + dkw, matching PyTorch's OIHW weight reshape.
    Call with x already cast to the matmul dtype (bf16) to avoid a second cast pass.
    """
    n, cin, h, w = x.shape
    ph, pw = kh // 2, kw // 2
    xp = jnp.pad(x, ((0, 0), (0, 0), (ph, ph), (pw, pw)))
    slabs = [xp[:, :, dkh:dkh + h, dkw:dkw + w] for dkh in range(kh) for dkw in range(kw)]
    stk = jnp.stack(slabs, axis=0)                 # (kh*kw, N, Cin, H, W)
    stk = jnp.transpose(stk, (1, 3, 4, 2, 0))      # (N, H, W, Cin, kh*kw)
    return stk.reshape(n * h * w, cin * kh * kw)


def _round_up(x, m):
    return (x + m - 1) // m * m


def _pad_cout(cout):
    """128 lanes for small Cout; multiple of 256 for Cout > 128 (fills 256-wide MXU)."""
    if cout <= LANE:
        return LANE
    return _round_up(cout, 2 * LANE)


def _pick_tile_rows(rows, feats, cpad, desired, inter_bytes, out_bytes):
    """Largest row tile whose double-buffered working set fits the v7x VMEM budget."""
    per_row_a = 2 * (feats * 2 + cpad * inter_bytes)          # kernel A: patches + y
    per_row_b = 2 * (cpad * inter_bytes + cpad * out_bytes)   # kernel B: y + out
    per_row = max(per_row_a, per_row_b)
    resident = 2 * feats * cpad * 2 + 8 * cpad * 4            # weight + small rows
    cap = max(LANE, ((VMEM_BUDGET_BYTES - resident) // per_row) // LANE * LANE)
    tr = 1024 if desired is None else desired
    tr = min(tr, cap, _round_up(rows, LANE))
    return max(LANE, _round_up(tr, LANE))


# --------------------------------------------------------------------------- wrapper
@functools.partial(jax.jit,
                   static_argnames=("kernel_size", "tile_rows", "inter_dtype"))
def conv_block_forward(x, weight, bias, gamma, beta, *, kernel_size=3,
                       tile_rows=None, inter_dtype=jnp.float32):
    """
    ConvBlock forward (default config: stride=1, add_norm=True, ReLU, no dropout).

    x:      (N, Cin, H, W) f32 (NCHW, matching PyTorch)
    weight: (Cout, Cin, KH, KW) (PyTorch OIHW)
    bias:   (Cout,)  -- unused: cancels exactly under training-mode BatchNorm
    gamma, beta: (Cout,) BatchNorm affine params
    returns (N, Cout, H, W) f32

    Notes:
      * Matmul inputs are bf16 (MXU-native); accumulation and BN statistics are f32, so
        batch mean/var are those of the bf16-quantized conv output (matched by the
        bf16 reference below).
      * `inter_dtype=jnp.bfloat16` halves intermediate HBM traffic for the conv output
        buffer at a small additional quantization cost.
      * Variance uses E[x^2]-E[x]^2 with f32 partial sums per tile; clamped at 0.
    """
    del bias  # cancelled by BN mean subtraction (training-mode batch statistics)
    n, cin, h, w = x.shape
    cout = weight.shape[0]
    kh = kw = kernel_size

    # bf16 BEFORE im2col: patch matrix is built once, directly in the matmul dtype.
    patches = _im2col_nchw(x.astype(jnp.bfloat16), kh, kw)     # (R, F) bf16
    rows, feats = patches.shape

    cpad = _pad_cout(cout)
    inter_bytes = jnp.dtype(inter_dtype).itemsize
    tile_r = _pick_tile_rows(rows, feats, cpad, tile_rows, inter_bytes, 4)
    num_tiles = pl.cdiv(rows, tile_r)
    rows_pad = num_tiles * tile_r
    if rows_pad != rows:
        # Zero rows are stats-neutral (no bias add -> zero patches give zero conv output).
        patches = jnp.pad(patches, ((0, rows_pad - rows), (0, 0)))

    # Weight: OIHW -> (F, Cout), lane-padded, bf16.
    w_mat = weight.reshape(cout, cin * kh * kw).T
    w_mat = jnp.pad(w_mat, ((0, 0), (0, cpad - cout))).astype(jnp.bfloat16)
    g_row = jnp.pad(gamma.astype(jnp.float32), (0, cpad - cout)).reshape(1, cpad)
    be_row = jnp.pad(beta.astype(jnp.float32), (0, cpad - cout)).reshape(1, cpad)

    # Explicit scoped-VMEM limits (default is only 16 MiB on v5e / 32 MiB on v6e/v7x).
    vmem_a = (2 * tile_r * feats * 2 + 2 * feats * cpad * 2
              + 2 * tile_r * cpad * inter_bytes + 8 * cpad * 4 + (4 << 20))
    vmem_b = (2 * tile_r * cpad * inter_bytes + 2 * tile_r * cpad * 4
              + 8 * cpad * 4 + (4 << 20))

    # ---- Pass A: conv matmul + per-tile partial BN sums (fully parallel row tiles).
    cost_a = pl.CostEstimate(
        flops=2 * rows_pad * feats * cpad + 3 * rows_pad * cpad,
        transcendentals=0,
        bytes_accessed=(rows_pad * feats * 2 + feats * cpad * 2
                        + rows_pad * cpad * inter_bytes + 2 * num_tiles * cpad * 4),
    )
    y_buf, part_sum, part_sumsq = pl.pallas_call(
        _conv_stats_kernel,
        out_shape=(
            jax.ShapeDtypeStruct((rows_pad, cpad), inter_dtype),
            jax.ShapeDtypeStruct((num_tiles, 1, cpad), jnp.float32),
            jax.ShapeDtypeStruct((num_tiles, 1, cpad), jnp.float32),
        ),
        grid=(num_tiles,),
        in_specs=[
            pl.BlockSpec((tile_r, feats), lambda i: (i, 0)),   # row tile of patches
            pl.BlockSpec((feats, cpad), lambda i: (0, 0)),     # resident weight
        ],
        out_specs=[
            pl.BlockSpec((tile_r, cpad), lambda i: (i, 0)),    # un-normalized conv output
            pl.BlockSpec((1, 1, cpad), lambda i: (i, 0, 0)),   # per-tile sum
            pl.BlockSpec((1, 1, cpad), lambda i: (i, 0, 0)),   # per-tile sum of squares
        ],
        compiler_params=pltpu.CompilerParams(
            dimension_semantics=("parallel",),
            vmem_limit_bytes=int(vmem_a),
        ),
        cost_estimate=cost_a,
    )(patches, w_mat)

    # ---- Tiny XLA combine: global BN statistics -> per-channel scale/shift rows.
    inv_count = 1.0 / float(rows)                     # true rows (padding contributes 0)
    total = jnp.sum(part_sum, axis=0)                 # (1, cpad)
    total_sq = jnp.sum(part_sumsq, axis=0)            # (1, cpad)
    mean = total * inv_count
    var = jnp.maximum(total_sq * inv_count - mean * mean, 0.0)
    inv_std = lax.rsqrt(var + BN_EPS)
    scale_row = g_row * inv_std
    shift_row = be_row - mean * scale_row

    # ---- Pass B: BN affine + ReLU (fully parallel row tiles, no matmul recompute).
    cost_b = pl.CostEstimate(
        flops=3 * rows_pad * cpad,
        transcendentals=0,
        bytes_accessed=rows_pad * cpad * (inter_bytes + 4) + 2 * cpad * 4,
    )
    out_flat = pl.pallas_call(
        _bn_relu_kernel,
        out_shape=jax.ShapeDtypeStruct((rows_pad, cpad), jnp.float32),
        grid=(num_tiles,),
        in_specs=[
            pl.BlockSpec((tile_r, cpad), lambda i: (i, 0)),    # y tile
            pl.BlockSpec((1, cpad), lambda i: (0, 0)),         # resident scale
            pl.BlockSpec((1, cpad), lambda i: (0, 0)),         # resident shift
        ],
        out_specs=pl.BlockSpec((tile_r, cpad), lambda i: (i, 0)),
        compiler_params=pltpu.CompilerParams(
            dimension_semantics=("parallel",),
            vmem_limit_bytes=int(vmem_b),
        ),
        cost_estimate=cost_b,
    )(y_buf, scale_row, shift_row)

    out = out_flat[:rows, :cout]                               # drop row/lane padding
    # (N*H*W, Cout) -> (N, H, W, Cout) -> NCHW (kept only for PyTorch layout parity).
    return jnp.transpose(out.reshape(n, h, w, cout), (0, 3, 1, 2))


# --------------------------------------------------------------------------- reference
def _reference_forward(x, weight, bias, gamma, beta, matmul_dtype=jnp.float32):
    """Pure-JAX reference (conv + bias + train-mode BN + ReLU) for validation."""
    y = lax.conv_general_dilated(
        x.astype(matmul_dtype), weight.astype(matmul_dtype),
        window_strides=(1, 1), padding="SAME",
        dimension_numbers=("NCHW", "OIHW", "NCHW"),
        preferred_element_type=jnp.float32)
    y = y + bias.reshape(1, -1, 1, 1).astype(jnp.float32)   # kept: must cancel under BN
    mean = jnp.mean(y, axis=(0, 2, 3), keepdims=True)
    var = jnp.mean((y - mean) ** 2, axis=(0, 2, 3), keepdims=True)
    y = (y - mean) * lax.rsqrt(var + BN_EPS)
    y = y * gamma.reshape(1, -1, 1, 1) + beta.reshape(1, -1, 1, 1)
    return jnp.maximum(y, 0.0)


if __name__ == "__main__":
    # ConvBlock(in_channels=4, out_channels=8, kernel_size=3, stride=1,
    #           add_norm=True, activation='ReLU', dropout=None)
    N, Cin, Cout, H, W, K = 2, 4, 8, 16, 16, 3

    key = jax.random.PRNGKey(0)
    kx, kw_, kb, kg, kbe = jax.random.split(key, 5)
    x = jax.random.normal(kx, (N, Cin, H, W), dtype=jnp.float32)
    fan_in = Cin * K * K
    weight = jax.random.normal(kw_, (Cout, Cin, K, K), dtype=jnp.float32) / jnp.sqrt(fan_in)
    bias = jax.random.normal(kb, (Cout,), dtype=jnp.float32) * 0.1
    gamma = 1.0 + 0.1 * jax.random.normal(kg, (Cout,), dtype=jnp.float32)
    beta = 0.05 * jax.random.normal(kbe, (Cout,), dtype=jnp.float32)

    # tile_rows=128 exercises multiple (parallel) row tiles at this toy size;
    # leave tile_rows=None on real shapes to let the VMEM-budget auto-tiler pick.
    out = jax.block_until_ready(
        conv_block_forward(x, weight, bias, gamma, beta, kernel_size=K, tile_rows=128))
    assert out.shape == (N, Cout, H, W)

    # Primary check: reference with identically bf16-quantized matmul inputs.
    ref_bf16 = jax.block_until_ready(
        _reference_forward(x, weight, bias, gamma, beta, matmul_dtype=jnp.bfloat16))
    assert jnp.allclose(out, ref_bf16, atol=2e-3, rtol=2e-3), "mismatch vs bf16-matched reference"

    # Sanity check vs. full-f32 module semantics (difference = bf16 input quantization).
    ref_f32 = jax.block_until_ready(
        _reference_forward(x, weight, bias, gamma, beta, matmul_dtype=jnp.float32))
    max_diff = float(jnp.max(jnp.abs(out - ref_f32)))
    assert max_diff < 0.1, f"unexpectedly large deviation vs f32 reference: {max_diff}"

    print("KERNEL_OK")
</pallas_src>

<mosaic_0001>
module attributes {stable_mosaic.version = 11 : i64} {
  func.func @_bn_relu_kernel(%arg0: i32, %arg1: memref<128x128xf32, #tpu.memory_space<vmem>>, %arg2: memref<1x128xf32, #tpu.memory_space<vmem>>, %arg3: memref<1x128xf32, #tpu.memory_space<vmem>>, %arg4: memref<128x128xf32, #tpu.memory_space<vmem>>) attributes {dimension_semantics = [#tpu.dimension_semantics<parallel>], iteration_bounds = array<i64: 4>, scalar_prefetch = 0 : i64, scratch_operands = 0 : i64, tpu.core_type = #tpu.core_type<tc>, window_params = [{transform_indices = @transform_0, window_bounds = array<i64: 128, 128>}, {pipeline_mode = #tpu.pipeline_mode<synchronous>, transform_indices = @transform_1, window_bounds = array<i64: 1, 128>}, {pipeline_mode = #tpu.pipeline_mode<synchronous>, transform_indices = @transform_2, window_bounds = array<i64: 1, 128>}, {transform_indices = @transform_3, window_bounds = array<i64: 128, 128>}]} {
    %c0 = arith.constant 0 : index
    %c0_0 = arith.constant 0 : index
    %0 = vector.load %arg1[%c0, %c0_0] : memref<128x128xf32, #tpu.memory_space<vmem>>, vector<128x128xf32>
    %c0_1 = arith.constant 0 : index
    %c0_2 = arith.constant 0 : index
    %1 = vector.load %arg2[%c0_1, %c0_2] : memref<1x128xf32, #tpu.memory_space<vmem>>, vector<1x128xf32>
    %2 = vector.broadcast %1 : vector<1x128xf32> to vector<128x128xf32>
    %3 = arith.mulf %0, %2 : vector<128x128xf32>
    %c0_3 = arith.constant 0 : index
    %c0_4 = arith.constant 0 : index
    %4 = vector.load %arg3[%c0_3, %c0_4] : memref<1x128xf32, #tpu.memory_space<vmem>>, vector<1x128xf32>
    %5 = vector.broadcast %4 : vector<1x128xf32> to vector<128x128xf32>
    %6 = arith.addf %3, %5 : vector<128x128xf32>
    %cst = arith.constant 0.000000e+00 : f32
    %7 = vector.broadcast %cst : f32 to vector<128x128xf32>
    %8 = arith.maximumf %6, %7 : vector<128x128xf32>
    %c0_5 = arith.constant 0 : index
    %c0_6 = arith.constant 0 : index
    %9 = vector.load %arg4[%c0_5, %c0_6] : memref<128x128xf32, #tpu.memory_space<vmem>>, vector<128x128xf32>
    tpu.vector_store %arg4[%c0_5, %c0_6], %8 {strides = array<i32>} : memref<128x128xf32, #tpu.memory_space<vmem>>, vector<128x128xf32>,
    return
  }
  func.func @transform_0(%arg0: i32) -> (i32, i32) {
    %c0_i32 = arith.constant 0 : i32
    %c0_i32_0 = arith.constant 0 : i32
    return %arg0, %c0_i32 : i32, i32
  }
  func.func @transform_1(%arg0: i32) -> (i32, i32) {
    %c0_i32 = arith.constant 0 : i32
    %c0_i32_0 = arith.constant 0 : i32
    %c0_i32_1 = arith.constant 0 : i32
    return %c0_i32, %c0_i32_0 : i32, i32
  }
  func.func @transform_2(%arg0: i32) -> (i32, i32) {
    %c0_i32 = arith.constant 0 : i32
    %c0_i32_0 = arith.constant 0 : i32
    %c0_i32_1 = arith.constant 0 : i32
    return %c0_i32, %c0_i32_0 : i32, i32
  }
  func.func @transform_3(%arg0: i32) -> (i32, i32) {
    %c0_i32 = arith.constant 0 : i32
    %c0_i32_0 = arith.constant 0 : i32
    return %arg0, %c0_i32 : i32, i32
  }
}

module attributes {stable_mosaic.version = 11 : i64} {
  func.func @_conv_stats_kernel(%arg0: i32, %arg1: memref<128x36xbf16, #tpu.memory_space<vmem>>, %arg2: memref<36x128xbf16, #tpu.memory_space<vmem>>, %arg3: memref<128x128xf32, #tpu.memory_space<vmem>>, %arg4: memref<1x1x128xf32, #tpu.memory_space<vmem>>, %arg5: memref<1x1x128xf32, #tpu.memory_space<vmem>>) attributes {dimension_semantics = [#tpu.dimension_semantics<parallel>], iteration_bounds = array<i64: 4>, scalar_prefetch = 0 : i64, scratch_operands = 0 : i64, tpu.core_type = #tpu.core_type<tc>, window_params = [{transform_indices = @transform_0, window_bounds = array<i64: 128, 36>}, {pipeline_mode = #tpu.pipeline_mode<synchronous>, transform_indices = @transform_1, window_bounds = array<i64: 36, 128>}, {transform_indices = @transform_2, window_bounds = array<i64: 128, 128>}, {transform_indices = @transform_3, window_bounds = array<i64: 1, 1, 128>}, {transform_indices = @transform_4, window_bounds = array<i64: 1, 1, 128>}]} {
    %c0 = arith.constant 0 : index
    %c0_0 = arith.constant 0 : index
    %0 = vector.load %arg1[%c0, %c0_0] : memref<128x36xbf16, #tpu.memory_space<vmem>>, vector<128x36xbf16>
    %c0_1 = arith.constant 0 : index
    %c0_2 = arith.constant 0 : index
    %1 = vector.load %arg2[%c0_1, %c0_2] : memref<36x128xbf16, #tpu.memory_space<vmem>>, vector<36x128xbf16>
    %cst = arith.constant dense<0.000000e+00> : vector<128x128xf32>
    %2 = tpu.matmul %0, %1, %cst {dimension_numbers = #tpu.dot_dimension_numbers<[1], [0], [0], [1], [0, 0, 1, 1], [], []>} : vector<128x36xbf16>, vector<36x128xbf16>, vector<128x128xf32> -> vector<128x128xf32>
    %c0_3 = arith.constant 0 : index
    %c0_4 = arith.constant 0 : index
    %3 = vector.load %arg3[%c0_3, %c0_4] : memref<128x128xf32, #tpu.memory_space<vmem>>, vector<128x128xf32>
    tpu.vector_store %arg3[%c0_3, %c0_4], %2 {strides = array<i32>} : memref<128x128xf32, #tpu.memory_space<vmem>>, vector<128x128xf32>,
    %cst_5 = arith.constant dense<0.000000e+00> : vector<128xf32>
    %4 = vector.multi_reduction <add>, %2, %cst_5 [0] : vector<128x128xf32> to vector<128xf32>
    %5 = vector.shape_cast %4 : vector<128xf32> to vector<1x128xf32>
    %6 = arith.mulf %2, %2 : vector<128x128xf32>
    %cst_6 = arith.constant dense<0.000000e+00> : vector<128xf32>
    %7 = vector.multi_reduction <add>, %6, %cst_6 [0] : vector<128x128xf32> to vector<128xf32>
    %8 = vector.shape_cast %7 : vector<128xf32> to vector<1x128xf32>
    %9 = vector.shape_cast %5 : vector<1x128xf32> to vector<1x1x128xf32>
    %c0_7 = arith.constant 0 : index
    %c0_8 = arith.constant 0 : index
    %c0_9 = arith.constant 0 : index
    %10 = vector.load %arg4[%c0_7, %c0_8, %c0_9] : memref<1x1x128xf32, #tpu.memory_space<vmem>>, vector<1x1x128xf32>
    tpu.vector_store %arg4[%c0_7, %c0_8, %c0_9], %9 {strides = array<i32>} : memref<1x1x128xf32, #tpu.memory_space<vmem>>, vector<1x1x128xf32>,
    %11 = vector.shape_cast %8 : vector<1x128xf32> to vector<1x1x128xf32>
    %c0_10 = arith.constant 0 : index
    %c0_11 = arith.constant 0 : index
    %c0_12 = arith.constant 0 : index
    %12 = vector.load %arg5[%c0_10, %c0_11, %c0_12] : memref<1x1x128xf32, #tpu.memory_space<vmem>>, vector<1x1x128xf32>
    tpu.vector_store %arg5[%c0_10, %c0_11, %c0_12], %11 {strides = array<i32>} : memref<1x1x128xf32, #tpu.memory_space<vmem>>, vector<1x1x128xf32>,
    return
  }
  func.func @transform_0(%arg0: i32) -> (i32, i32) {
    %c0_i32 = arith.constant 0 : i32
    %c0_i32_0 = arith.constant 0 : i32
    return %arg0, %c0_i32 : i32, i32
  }
  func.func @transform_1(%arg0: i32) -> (i32, i32) {
    %c0_i32 = arith.constant 0 : i32
    %c0_i32_0 = arith.constant 0 : i32
    %c0_i32_1 = arith.constant 0 : i32
    return %c0_i32, %c0_i32_0 : i32, i32
  }
  func.func @transform_2(%arg0: i32) -> (i32, i32) {
    %c0_i32 = arith.constant 0 : i32
    %c0_i32_0 = arith.constant 0 : i32
    return %arg0, %c0_i32 : i32, i32
  }
  func.func @transform_3(%arg0: i32) -> (i32, i32, i32) {
    %c0_i32 = arith.constant 0 : i32
    %c0_i32_0 = arith.constant 0 : i32
    %c0_i32_1 = arith.constant 0 : i32
    return %arg0, %c0_i32, %c0_i32_0 : i32, i32, i32
  }
  func.func @transform_4(%arg0: i32) -> (i32, i32, i32) {
    %c0_i32 = arith.constant 0 : i32
    %c0_i32_0 = arith.constant 0 : i32
    %c0_i32_1 = arith.constant 0 : i32
    return %arg0, %c0_i32, %c0_i32_0 : i32, i32, i32
  }
}

</mosaic_0001>

<llo_original>
// kernel: conv_block_forward.3
$region0: #{conv_block_forward.3}
  #allocation0 [shape = 'u32[]', space=smem, size = 0x4, offset = 0x4, fixed_abs, tag = 'smem constant byte address 0x4 - core index']
  #allocation1 [shape = 'u32[72,128]{1,0:T(1,128)}', space=vmem, size = 0x9000, scoped, tag = 'internal scratch']
  %s0 = inlined_call_operand.vmem [shape: f32[512,128], index: 0, kind: input, shape index: {}]
  %s1 = inlined_call_operand.vmem [shape: f32[1,128], index: 1, kind: input, shape index: {}]
  %s2 = inlined_call_operand.vmem [shape: f32[1,128], index: 2, kind: input, shape index: {}]
  %s3 = inlined_call_operand.vmem [shape: f32[512,128], index: 3, kind: output, shape index: {}]
  %s4 = sld [smem:[#allocation0]]
  $region45: #{conv_block_forward.3} parent=0
    _
  %s6 = ssub.s32 1, %s4
  %s7 = scalar_select 0, %s6, %s4
  loop: start=0, step=1, limit=6
  $region2: #{conv_block_forward.3} parent=0 // loop_pre_header
    _
  $region3: #{conv_block_forward.3} parent=0 // loop_header
    %s9 = sphi 0, %s13
    %p10 = scmp.ge.s32.totalorder %s9, 6
    %s19 = sphi 0, %s21
    %s22 = sphi 0, %s19
    %s23 = sphi 0, %s22
    %s39 = sphi 0, %s23
    %s43 = sphi 0, %s43
    %s45 = sphi 0, %s43
    %s46 = sphi 0, %s45
    %s60 = sphi 0, %s46
    %s64 = sphi 0, %s64
    %s66 = sphi 0, %s64
    %s67 = sphi 0, %s66
    %s81 = sphi 0, %s67
    %s87 = sphi 0, %s89
    %s90 = sphi 0, %s87
    %s91 = sphi 0, %s90
    %s107 = sphi 0, %s91
  $region4: #{conv_block_forward.3} parent=0 // loop_header_branch
    %12 = sbr.rel (%p10) target = $region8
  $region5: #{conv_block_forward.3} parent=0 // loop_body
    %s14 = ssub.s32 %s9, 1
    %s15 = ssub.s32 %s9, 2
    %s16 = sadd.s32 %s9, 1
    %s17 = ssub.s32 %s9, %s16
    %p18 = scmp.eq.s32.totalorder %s17, 0
    %s20 = sadd.s32 %s19, 1
    %s21 = scalar_select %p18, %s19, %s20
    %p24 = pneg %p18
    %p25 = scmp.eq.s32.totalorder %s9, 3
    %p26 = por %p24, %p25
    %p27 = scmp.ne.s32.totalorder %s19, %s22
    %p28 = scmp.eq.s32.totalorder %s9, 0
    %p29 = por %p27, %p28
    %p30 = scmp.ne.s32.totalorder %s19, %s22
    %p31 = scmp.eq.s32.totalorder %s14, 3
    %p32 = por %p30, %p31
    %p33 = scmp.ne.s32.totalorder %s22, %s23
    %p34 = scmp.eq.s32.totalorder %s14, 0
    %p35 = por %p33, %p34
    %p36 = scmp.ne.s32.totalorder %s22, %s23
    %p37 = scmp.eq.s32.totalorder %s15, 3
    %p38 = por %p36, %p37
    %p40 = scmp.ne.s32.totalorder %s23, %s39
    %p41 = scmp.eq.s32.totalorder %s15, 0
    %p42 = por %p40, %p41
    %s44 = sadd.s32 %s43, 1
    %p47 = scmp.eq.s32.totalorder %s9, 3
    %p48 = scmp.ne.s32.totalorder %s43, %s45
    %p49 = scmp.eq.s32.totalorder %s9, 0
    %p50 = por %p48, %p49
    %p51 = scmp.ne.s32.totalorder %s43, %s45
    %p52 = scmp.eq.s32.totalorder %s14, 3
    %p53 = por %p51, %p52
    %p54 = scmp.ne.s32.totalorder %s45, %s46
    %p55 = scmp.eq.s32.totalorder %s14, 0
    %p56 = por %p54, %p55
    %p57 = scmp.ne.s32.totalorder %s45, %s46
    %p58 = scmp.eq.s32.totalorder %s15, 3
    %p59 = por %p57, %p58
    %p61 = scmp.ne.s32.totalorder %s46, %s60
    %p62 = scmp.eq.s32.totalorder %s15, 0
    %p63 = por %p61, %p62
    %s65 = sadd.s32 %s64, 1
    %p68 = scmp.eq.s32.totalorder %s9, 3
    %p69 = scmp.ne.s32.totalorder %s64, %s66
    %p70 = scmp.eq.s32.totalorder %s9, 0
    %p71 = por %p69, %p70
    %p72 = scmp.ne.s32.totalorder %s64, %s66
    %p73 = scmp.eq.s32.totalorder %s14, 3
    %p74 = por %p72, %p73
    %p75 = scmp.ne.s32.totalorder %s66, %s67
    %p76 = scmp.eq.s32.totalorder %s14, 0
    %p77 = por %p75, %p76
    %p78 = scmp.ne.s32.totalorder %s66, %s67
    %p79 = scmp.eq.s32.totalorder %s15, 3
    %p80 = por %p78, %p79
    %p82 = scmp.ne.s32.totalorder %s67, %s81
    %p83 = scmp.eq.s32.totalorder %s15, 0
    %p84 = por %p82, %p83
    %s85 = ssub.s32 %s9, %s16
    %p86 = scmp.eq.s32.totalorder %s85, 0
    %s88 = sadd.s32 %s87, 1
    %s89 = scalar_select %p86, %s87, %s88
    %p92 = pneg %p86
    %p93 = scmp.eq.s32.totalorder %s9, 3
    %p94 = por %p92, %p93
    %p95 = scmp.ne.s32.totalorder %s87, %s90
    %p96 = scmp.eq.s32.totalorder %s9, 0
    %p97 = por %p95, %p96
    %p98 = scmp.ne.s32.totalorder %s87, %s90
    %p99 = scmp.eq.s32.totalorder %s14, 3
    %p100 = por %p98, %p99
    %p101 = scmp.ne.s32.totalorder %s90, %s91
    %p102 = scmp.eq.s32.totalorder %s14, 0
    %p103 = por %p101, %p102
    %p104 = scmp.ne.s32.totalorder %s90, %s91
    %p105 = scmp.eq.s32.totalorder %s15, 3
    %p106 = por %p104, %p105
    %p108 = scmp.ne.s32.totalorder %s91, %s107
    %p109 = scmp.eq.s32.totalorder %s15, 0
    %p110 = por %p108, %p109
    %p111 = scmp.le.s32.totalorder 1, %s9
    %p112 = scmp.lt.s32.totalorder %s9, 5
    %p113 = pnand %p111, %p112
    %p114 = pneg %p113
    // Predicated region
    $region9: #{conv_block_forward.3} parent=5 // pred_check
      _
    $region10: #{conv_block_forward.3} parent=5 // pred_check_branch
      %116 = sbr.rel (%p113) target = $region12
    $region11: #{conv_block_forward.3} parent=5 // pred_region
      %s117 = ssub.s32 %s9, 1
      // Predicated region
      $region13: #{conv_block_forward.3} parent=11 // pred_check
        %p118 = pneg %p56
      $region14: #{conv_block_forward.3} parent=11 // pred_check_branch
        %120 = sbr.rel (%p118) target = $region16
      $region15: #{conv_block_forward.3} parent=11 // pred_region
        _
      $region16: #{conv_block_forward.3} parent=11 // pred_fallthru
        _
      // Predicated region
      $region17: #{conv_block_forward.3} parent=11 // pred_check
        %p121 = pneg %p77
      $region18: #{conv_block_forward.3} parent=11 // pred_check_branch
        %123 = sbr.rel (%p121) target = $region20
      $region19: #{conv_block_forward.3} parent=11 // pred_region
        _
      $region20: #{conv_block_forward.3} parent=11 // pred_fallthru
        _
    $region12: #{conv_block_forward.3} parent=5 // pred_fallthru
      _
    %p124 = scmp.lt.s32.totalorder %s9, 4
    // Predicated region
    $region21: #{conv_block_forward.3} parent=5 // pred_check
      %p125 = pneg %p124
    $region22: #{conv_block_forward.3} parent=5 // pred_check_branch
      %127 = sbr.rel (%p125) target = $region24
    $region23: #{conv_block_forward.3} parent=5 // pred_region
      // Predicated region
      $region25: #{conv_block_forward.3} parent=23 // pred_check
        %p128 = pneg %p29
      $region26: #{conv_block_forward.3} parent=23 // pred_check_branch
        %130 = sbr.rel (%p128) target = $region28
      $region27: #{conv_block_forward.3} parent=23 // pred_region
        %s131 = smul.u32 16, %s9
        %p132 = scmp.lt.s32.totalorder %s131, 63
        %s133 = scalar_select %p132, %s131, 63
        %s134 = smul.addr %s133, 8
        %s135 = scalar_lea.vmem %s0, %s134
        %s136 = smul.u32 16, %s9
      $region28: #{conv_block_forward.3} parent=23 // pred_fallthru
        _
    $region24: #{conv_block_forward.3} parent=5 // pred_fallthru
      _
    %p137 = scmp.le.s32.totalorder 1, %s9
    %p138 = scmp.lt.s32.totalorder %s9, 5
    %p139 = pnand %p137, %p138
    %p140 = pneg %p139
    // Predicated region
    $region29: #{conv_block_forward.3} parent=5 // pred_check
      _
    $region30: #{conv_block_forward.3} parent=5 // pred_check_branch
      %142 = sbr.rel (%p139) target = $region32
    $region31: #{conv_block_forward.3} parent=5 // pred_region
      %s143 = ssub.s32 %s9, 1
      %s144 = smul.u32 16, %s14
      %p145 = scmp.lt.s32.totalorder %s144, 63
      %s146 = scalar_select %p145, %s144, 63
      %s147 = smul.addr %s146, 8
      %s148 = scalar_lea.vmem %s0, %s147
      %p149 = pneg %p35
      %p150 = pneg %p32
      %p151 = pneg %p56
      %p152 = pneg %p53
      %p153 = pneg %p77
      %p154 = pneg %p74
      %p155 = pneg %p103
      %p156 = pneg %p100
      %s157 = smul.u32 16, %s14
      %p158 = scmp.lt.s32.totalorder %s157, 63
      %s159 = scalar_select %p158, %s157, 63
      %s160 = smul.addr %s159, 8
      %s161 = scalar_lea.vmem %s3, %s160
      %s162 = smul.u32 16, %s14
      %p163 = scmp.lt.s32.totalorder %s162, 63
      %s164 = scalar_select %p163, %s162, 63
      %s165 = smul.addr %s164, 8
      %s166 = scalar_lea.vmem %s0, %s165
      %s167 = smul.u32 16, %s14
      %s168 = smul.u32 16, %s14
      %p169 = scmp.lt.s32.totalorder %s168, 63
      %s170 = scalar_select %p169, %s168, 63
      %s171 = smul.addr %s170, 8
      %s172 = scalar_lea.vmem %s3, %s171
      %s173 = smul.u32 16, %s14
      %v174 = vld [vmem:[%s166] sm:$0xff]
      %v175 = vld [vmem:[%s166 + $0x8] sm:$0xff]
      %v176 = vld [vmem:[%s166 + $0x10] sm:$0xff]
      %v177 = vld [vmem:[%s166 + $0x18] sm:$0xff]
      %v178 = vld [vmem:[%s166 + $0x20] sm:$0xff]
      %v179 = vld [vmem:[%s166 + $0x28] sm:$0xff]
      %v180 = vld [vmem:[%s166 + $0x30] sm:$0xff]
      %v181 = vld [vmem:[%s166 + $0x38] sm:$0xff]
      %v182 = vld [vmem:[%s166 + $0x40] sm:$0xff]
      %v183 = vld [vmem:[%s166 + $0x48] sm:$0xff]
      %v184 = vld [vmem:[%s166 + $0x50] sm:$0xff]
      %v185 = vld [vmem:[%s166 + $0x58] sm:$0xff]
      %v186 = vld [vmem:[%s166 + $0x60] sm:$0xff]
      %v187 = vld [vmem:[%s166 + $0x68] sm:$0xff]
      %v188 = vld [vmem:[%s166 + $0x70] sm:$0xff]
      %v189 = vld [vmem:[%s166 + $0x78] sm:$0xff]
      %v190 = vld [vmem:[%s1] sm:$0x1]
      %v192 = vperm.slane %v190, 0
      %v194 = vmul.f32 %v174, %v192
      %v195 = vmul.f32 %v175, %v192
      %v196 = vmul.f32 %v176, %v192
      %v197 = vmul.f32 %v177, %v192
      %v198 = vmul.f32 %v178, %v192
      %v199 = vmul.f32 %v179, %v192
      %v200 = vmul.f32 %v180, %v192
      %v201 = vmul.f32 %v181, %v192
      %v202 = vmul.f32 %v182, %v192
      %v203 = vmul.f32 %v183, %v192
      %v204 = vmul.f32 %v184, %v192
      %v205 = vmul.f32 %v185, %v192
      %v206 = vmul.f32 %v186, %v192
      %v207 = vmul.f32 %v187, %v192
      %v208 = vmul.f32 %v188, %v192
      %v209 = vmul.f32 %v189, %v192
      %v210 = vld [vmem:[%s2] sm:$0x1]
      %v212 = vperm.slane %v210, 0
      %v214 = vadd.f32 %v194, %v212
      %v215 = vadd.f32 %v195, %v212
      %v216 = vadd.f32 %v196, %v212
      %v217 = vadd.f32 %v197, %v212
      %v218 = vadd.f32 %v198, %v212
      %v219 = vadd.f32 %v199, %v212
      %v220 = vadd.f32 %v200, %v212
      %v221 = vadd.f32 %v201, %v212
      %v222 = vadd.f32 %v202, %v212
      %v223 = vadd.f32 %v203, %v212
      %v224 = vadd.f32 %v204, %v212
      %v225 = vadd.f32 %v205, %v212
      %v226 = vadd.f32 %v206, %v212
      %v227 = vadd.f32 %v207, %v212
      %v228 = vadd.f32 %v208, %v212
      %v229 = vadd.f32 %v209, %v212
      %v230 = vmax.f32 %v214, 0.0
      %v231 = vmax.f32 %v215, 0.0
      %v232 = vmax.f32 %v216, 0.0
      %v233 = vmax.f32 %v217, 0.0
      %v234 = vmax.f32 %v218, 0.0
      %v235 = vmax.f32 %v219, 0.0
      %v236 = vmax.f32 %v220, 0.0
      %v237 = vmax.f32 %v221, 0.0
      %v238 = vmax.f32 %v222, 0.0
      %v239 = vmax.f32 %v223, 0.0
      %v240 = vmax.f32 %v224, 0.0
      %v241 = vmax.f32 %v225, 0.0
      %v242 = vmax.f32 %v226, 0.0
      %v243 = vmax.f32 %v227, 0.0
      %v244 = vmax.f32 %v228, 0.0
      %v245 = vmax.f32 %v229, 0.0
      %246 = vst [vmem:[%s172] sm:$0xff] %v230
      %247 = vst [vmem:[%s172 + $0x8] sm:$0xff] %v231
      %248 = vst [vmem:[%s172 + $0x10] sm:$0xff] %v232
      %249 = vst [vmem:[%s172 + $0x18] sm:$0xff] %v233
      %250 = vst [vmem:[%s172 + $0x20] sm:$0xff] %v234
      %251 = vst [vmem:[%s172 + $0x28] sm:$0xff] %v235
      %252 = vst [vmem:[%s172 + $0x30] sm:$0xff] %v236
      %253 = vst [vmem:[%s172 + $0x38] sm:$0xff] %v237
      %254 = vst [vmem:[%s172 + $0x40] sm:$0xff] %v238
      %255 = vst [vmem:[%s172 + $0x48] sm:$0xff] %v239
      %256 = vst [vmem:[%s172 + $0x50] sm:$0xff] %v240
      %257 = vst [vmem:[%s172 + $0x58] sm:$0xff] %v241
      %258 = vst [vmem:[%s172 + $0x60] sm:$0xff] %v242
      %259 = vst [vmem:[%s172 + $0x68] sm:$0xff] %v243
      %260 = vst [vmem:[%s172 + $0x70] sm:$0xff] %v244
      %261 = vst [vmem:[%s172 + $0x78] sm:$0xff] %v245
      %s262 = smul.u32 16, %s14
      %p263 = scmp.lt.s32.totalorder %s262, 63
      %s264 = scalar_select %p263, %s262, 63
      %s265 = smul.addr %s264, 8
      %s266 = scalar_lea.vmem %s3, %s265
      // Predicated region
      $region33: #{conv_block_forward.3} parent=31 // pred_check
        %p267 = pneg %p100
      $region34: #{conv_block_forward.3} parent=31 // pred_check_branch
        %269 = sbr.rel (%p267) target = $region36
      $region35: #{conv_block_forward.3} parent=31 // pred_region
        %s270 = smul.u32 16, %s14
      $region36: #{conv_block_forward.3} parent=31 // pred_fallthru
        _
    $region32: #{conv_block_forward.3} parent=5 // pred_fallthru
      _
    %p271 = scmp.le.s32.totalorder 2, %s9
    // Predicated region
    $region37: #{conv_block_forward.3} parent=5 // pred_check
      %p272 = pneg %p271
    $region38: #{conv_block_forward.3} parent=5 // pred_check_branch
      %274 = sbr.rel (%p272) target = $region40
    $region39: #{conv_block_forward.3} parent=5 // pred_region
      %s275 = ssub.s32 %s9, 2
      // Predicated region
      $region41: #{conv_block_forward.3} parent=39 // pred_check
        %p276 = pneg %p106
      $region42: #{conv_block_forward.3} parent=39 // pred_check_branch
        %278 = sbr.rel (%p276) target = $region44
      $region43: #{conv_block_forward.3} parent=39 // pred_region
        %s279 = smul.u32 16, %s15
        %p280 = scmp.lt.s32.totalorder %s279, 63
        %s281 = scalar_select %p280, %s279, 63
        %s282 = smul.addr %s281, 8
        %s283 = scalar_lea.vmem %s3, %s282
      $region44: #{conv_block_forward.3} parent=39 // pred_fallthru
        _
    $region40: #{conv_block_forward.3} parent=5 // pred_fallthru
      _
  $region6: #{conv_block_forward.3} parent=0 // loop_footer
    %s13 = sadd.s32 1, %s9
  $region7: #{conv_block_forward.3} parent=0 // loop_footer_branch
    %8 = sbr.rel target = $region3
  $region8: #{conv_block_forward.3} parent=0 // loop_exit
    _

// kernel: conv_block_forward.2
$region0: #{conv_block_forward.2}
  #allocation0 [shape = 'u32[]', space=smem, size = 0x4, offset = 0x4, fixed_abs, tag = 'smem constant byte address 0x4 - core index']
  #allocation1 [shape = 'u32[72,128]{1,0:T(1,128)}', space=vmem, size = 0x9000, scoped, tag = 'internal scratch']
  %s0 = inlined_call_operand.vmem [shape: bf16[512,36], index: 0, kind: input, shape index: {}]
  %s1 = inlined_call_operand.vmem [shape: bf16[36,128], index: 1, kind: input, shape index: {}]
  %s2 = inlined_call_operand.vmem [shape: f32[512,128], index: 2, kind: output, shape index: {0}]
  %s3 = inlined_call_operand.vmem [shape: f32[4,1,128], index: 3, kind: output, shape index: {1}]
  %s4 = inlined_call_operand.vmem [shape: f32[4,1,128], index: 4, kind: output, shape index: {2}]
  %5 = xla_tuple %s2, %s3, %s4
  %s6 = sld [smem:[#allocation0]]
  $region57: #{conv_block_forward.2} parent=0
    _
  %s8 = ssub.s32 1, %s6
  %s9 = scalar_select 0, %s8, %s6
  loop: start=0, step=1, limit=6
  $region2: #{conv_block_forward.2} parent=0 // loop_pre_header
    _
  $region3: #{conv_block_forward.2} parent=0 // loop_header
    %s11 = sphi 0, %s15
    %p12 = scmp.ge.s32.totalorder %s11, 6
    %s21 = sphi 0, %s23
    %s24 = sphi 0, %s21
    %s25 = sphi 0, %s24
    %s41 = sphi 0, %s25
    %s45 = sphi 0, %s45
    %s47 = sphi 0, %s45
    %s48 = sphi 0, %s47
    %s62 = sphi 0, %s48
    %s68 = sphi 0, %s70
    %s71 = sphi 0, %s68
    %s72 = sphi 0, %s71
    %s88 = sphi 0, %s72
    %s94 = sphi 0, %s96
    %s97 = sphi 0, %s94
    %s98 = sphi 0, %s97
    %s114 = sphi 0, %s98
    %s120 = sphi 0, %s122
    %s123 = sphi 0, %s120
    %s124 = sphi 0, %s123
    %s140 = sphi 0, %s124
  $region4: #{conv_block_forward.2} parent=0 // loop_header_branch
    %14 = sbr.rel (%p12) target = $region8
  $region5: #{conv_block_forward.2} parent=0 // loop_body
    %s16 = ssub.s32 %s11, 1
    %s17 = ssub.s32 %s11, 2
    %s18 = sadd.s32 %s11, 1
    %s19 = ssub.s32 %s11, %s18
    %p20 = scmp.eq.s32.totalorder %s19, 0
    %s22 = sadd.s32 %s21, 1
    %s23 = scalar_select %p20, %s21, %s22
    %p26 = pneg %p20
    %p27 = scmp.eq.s32.totalorder %s11, 3
    %p28 = por %p26, %p27
    %p29 = scmp.ne.s32.totalorder %s21, %s24
    %p30 = scmp.eq.s32.totalorder %s11, 0
    %p31 = por %p29, %p30
    %p32 = scmp.ne.s32.totalorder %s21, %s24
    %p33 = scmp.eq.s32.totalorder %s16, 3
    %p34 = por %p32, %p33
    %p35 = scmp.ne.s32.totalorder %s24, %s25
    %p36 = scmp.eq.s32.totalorder %s16, 0
    %p37 = por %p35, %p36
    %p38 = scmp.ne.s32.totalorder %s24, %s25
    %p39 = scmp.eq.s32.totalorder %s17, 3
    %p40 = por %p38, %p39
    %p42 = scmp.ne.s32.totalorder %s25, %s41
    %p43 = scmp.eq.s32.totalorder %s17, 0
    %p44 = por %p42, %p43
    %s46 = sadd.s32 %s45, 1
    %p49 = scmp.eq.s32.totalorder %s11, 3
    %p50 = scmp.ne.s32.totalorder %s45, %s47
    %p51 = scmp.eq.s32.totalorder %s11, 0
    %p52 = por %p50, %p51
    %p53 = scmp.ne.s32.totalorder %s45, %s47
    %p54 = scmp.eq.s32.totalorder %s16, 3
    %p55 = por %p53, %p54
    %p56 = scmp.ne.s32.totalorder %s47, %s48
    %p57 = scmp.eq.s32.totalorder %s16, 0
    %p58 = por %p56, %p57
    %p59 = scmp.ne.s32.totalorder %s47, %s48
    %p60 = scmp.eq.s32.totalorder %s17, 3
    %p61 = por %p59, %p60
    %p63 = scmp.ne.s32.totalorder %s48, %s62
    %p64 = scmp.eq.s32.totalorder %s17, 0
    %p65 = por %p63, %p64
    %s66 = ssub.s32 %s11, %s18
    %p67 = scmp.eq.s32.totalorder %s66, 0
    %s69 = sadd.s32 %s68, 1
    %s70 = scalar_select %p67, %s68, %s69
    %p73 = pneg %p67
    %p74 = scmp.eq.s32.totalorder %s11, 3
    %p75 = por %p73, %p74
    %p76 = scmp.ne.s32.totalorder %s68, %s71
    %p77 = scmp.eq.s32.totalorder %s11, 0
    %p78 = por %p76, %p77
    %p79 = scmp.ne.s32.totalorder %s68, %s71
    %p80 = scmp.eq.s32.totalorder %s16, 3
    %p81 = por %p79, %p80
    %p82 = scmp.ne.s32.totalorder %s71, %s72
    %p83 = scmp.eq.s32.totalorder %s16, 0
    %p84 = por %p82, %p83
    %p85 = scmp.ne.s32.totalorder %s71, %s72
    %p86 = scmp.eq.s32.totalorder %s17, 3
    %p87 = por %p85, %p86
    %p89 = scmp.ne.s32.totalorder %s72, %s88
    %p90 = scmp.eq.s32.totalorder %s17, 0
    %p91 = por %p89, %p90
    %s92 = ssub.s32 %s11, %s18
    %p93 = scmp.eq.s32.totalorder %s92, 0
    %s95 = sadd.s32 %s94, 1
    %s96 = scalar_select %p93, %s94, %s95
    %p99 = pneg %p93
    %p100 = scmp.eq.s32.totalorder %s11, 3
    %p101 = por %p99, %p100
    %p102 = scmp.ne.s32.totalorder %s94, %s97
    %p103 = scmp.eq.s32.totalorder %s11, 0
    %p104 = por %p102, %p103
    %p105 = scmp.ne.s32.totalorder %s94, %s97
    %p106 = scmp.eq.s32.totalorder %s16, 3
    %p107 = por %p105, %p106
    %p108 = scmp.ne.s32.totalorder %s97, %s98
    %p109 = scmp.eq.s32.totalorder %s16, 0
    %p110 = por %p108, %p109
    %p111 = scmp.ne.s32.totalorder %s97, %s98
    %p112 = scmp.eq.s32.totalorder %s17, 3
    %p113 = por %p111, %p112
    %p115 = scmp.ne.s32.totalorder %s98, %s114
    %p116 = scmp.eq.s32.totalorder %s17, 0
    %p117 = por %p115, %p116
    %s118 = ssub.s32 %s11, %s18
    %p119 = scmp.eq.s32.totalorder %s118, 0
    %s121 = sadd.s32 %s120, 1
    %s122 = scalar_select %p119, %s120, %s121
    %p125 = pneg %p119
    %p126 = scmp.eq.s32.totalorder %s11, 3
    %p127 = por %p125, %p126
    %p128 = scmp.ne.s32.totalorder %s120, %s123
    %p129 = scmp.eq.s32.totalorder %s11, 0
    %p130 = por %p128, %p129
    %p131 = scmp.ne.s32.totalorder %s120, %s123
    %p132 = scmp.eq.s32.totalorder %s16, 3
    %p133 = por %p131, %p132
    %p134 = scmp.ne.s32.totalorder %s123, %s124
    %p135 = scmp.eq.s32.totalorder %s16, 0
    %p136 = por %p134, %p135
    %p137 = scmp.ne.s32.totalorder %s123, %s124
    %p138 = scmp.eq.s32.totalorder %s17, 3
    %p139 = por %p137, %p138
    %p141 = scmp.ne.s32.totalorder %s124, %s140
    %p142 = scmp.eq.s32.totalorder %s17, 0
    %p143 = por %p141, %p142
    %p144 = scmp.le.s32.totalorder 1, %s11
    %p145 = scmp.lt.s32.totalorder %s11, 5
    %p146 = pnand %p144, %p145
    %p147 = pneg %p146
    // Predicated region
    $region9: #{conv_block_forward.2} parent=5 // pred_check
      _
    $region10: #{conv_block_forward.2} parent=5 // pred_check_branch
      %149 = sbr.rel (%p146) target = $region12
    $region11: #{conv_block_forward.2} parent=5 // pred_region
      %s150 = ssub.s32 %s11, 1
      // Predicated region
      $region13: #{conv_block_forward.2} parent=11 // pred_check
        %p151 = pneg %p58
      $region14: #{conv_block_forward.2} parent=11 // pred_check_branch
        %153 = sbr.rel (%p151) target = $region16
      $region15: #{conv_block_forward.2} parent=11 // pred_region
        _
      $region16: #{conv_block_forward.2} parent=11 // pred_fallthru
        _
    $region12: #{conv_block_forward.2} parent=5 // pred_fallthru
      _
    %p154 = scmp.lt.s32.totalorder %s11, 4
    // Predicated region
    $region17: #{conv_block_forward.2} parent=5 // pred_check
      %p155 = pneg %p154
    $region18: #{conv_block_forward.2} parent=5 // pred_check_branch
      %157 = sbr.rel (%p155) target = $region20
    $region19: #{conv_block_forward.2} parent=5 // pred_region
      // Predicated region
      $region21: #{conv_block_forward.2} parent=19 // pred_check
        %p158 = pneg %p31
      $region22: #{conv_block_forward.2} parent=19 // pred_check_branch
        %160 = sbr.rel (%p158) target = $region24
      $region23: #{conv_block_forward.2} parent=19 // pred_region
        %s161 = smul.u32 16, %s11
        %p162 = scmp.lt.s32.totalorder %s161, 63
        %s163 = scalar_select %p162, %s161, 63
        %s164 = smul.addr %s163, 4
        %s165 = scalar_lea.vmem %s0, %s164
        %s166 = smul.u32 16, %s11
      $region24: #{conv_block_forward.2} parent=19 // pred_fallthru
        _
    $region20: #{conv_block_forward.2} parent=5 // pred_fallthru
      _
    %p167 = scmp.le.s32.totalorder 1, %s11
    %p168 = scmp.lt.s32.totalorder %s11, 5
    %p169 = pnand %p167, %p168
    %p170 = pneg %p169
    // Predicated region
    $region25: #{conv_block_forward.2} parent=5 // pred_check
      _
    $region26: #{conv_block_forward.2} parent=5 // pred_check_branch
      %172 = sbr.rel (%p169) target = $region28
    $region27: #{conv_block_forward.2} parent=5 // pred_region
      %s173 = ssub.s32 %s11, 1
      %s174 = smul.u32 16, %s16
      %p175 = scmp.lt.s32.totalorder %s174, 63
      %s176 = scalar_select %p175, %s174, 63
      %s177 = smul.addr %s176, 4
      %s178 = scalar_lea.vmem %s0, %s177
      %p179 = pneg %p37
      %p180 = pneg %p34
      %p181 = pneg %p58
      %p182 = pneg %p55
      %p183 = pneg %p84
      %p184 = pneg %p81
      %s185 = smul.u32 16, %s16
      %p186 = scmp.lt.s32.totalorder %s185, 63
      %s187 = scalar_select %p186, %s185, 63
      %s188 = smul.addr %s187, 8
      %s189 = scalar_lea.vmem %s2, %s188
      %p190 = pneg %p110
      %p191 = pneg %p107
      %p192 = scmp.lt.s32.totalorder %s16, 3
      %s193 = scalar_select %p192, %s16, 3
      %s194 = scalar_lea.vmem %s3, %s193
      %p195 = pneg %p136
      %p196 = pneg %p133
      %p197 = scmp.lt.s32.totalorder %s16, 3
      %s198 = scalar_select %p197, %s16, 3
      %s199 = scalar_lea.vmem %s4, %s198
      %s200 = smul.u32 16, %s16
      %p201 = scmp.lt.s32.totalorder %s200, 63
      %s202 = scalar_select %p201, %s200, 63
      %s203 = smul.addr %s202, 4
      %s204 = scalar_lea.vmem %s0, %s203
      %s205 = smul.u32 16, %s16
      %s206 = smul.u32 16, %s16
      %p207 = scmp.lt.s32.totalorder %s206, 63
      %s208 = scalar_select %p207, %s206, 63
      %s209 = smul.addr %s208, 8
      %s210 = scalar_lea.vmem %s2, %s209
      %s211 = smul.u32 16, %s16
      %p212 = scmp.lt.s32.totalorder %s16, 3
      %s213 = scalar_select %p212, %s16, 3
      %s214 = scalar_lea.vmem %s3, %s213
      %p215 = scmp.lt.s32.totalorder %s16, 3
      %s216 = scalar_select %p215, %s16, 3
      %s217 = scalar_lea.vmem %s4, %s216
      %v219 = vld [vmem:[%s204] sm:$0xf]
      %v220 = vld [vmem:[%s204 + $0x4] sm:$0xf]
      %v221 = vld [vmem:[%s204 + $0x8] sm:$0xf]
      %v222 = vld [vmem:[%s204 + $0xc] sm:$0xf]
      %v223 = vld [vmem:[%s204 + $0x10] sm:$0xf]
      %v224 = vld [vmem:[%s204 + $0x14] sm:$0xf]
      %v225 = vld [vmem:[%s204 + $0x18] sm:$0xf]
      %v226 = vld [vmem:[%s204 + $0x1c] sm:$0xf]
      %v227 = vld [vmem:[%s204 + $0x20] sm:$0xf]
      %v228 = vld [vmem:[%s204 + $0x24] sm:$0xf]
      %v229 = vld [vmem:[%s204 + $0x28] sm:$0xf]
      %v230 = vld [vmem:[%s204 + $0x2c] sm:$0xf]
      %v231 = vld [vmem:[%s204 + $0x30] sm:$0xf]
      %v232 = vld [vmem:[%s204 + $0x34] sm:$0xf]
      %v233 = vld [vmem:[%s204 + $0x38] sm:$0xf]
      %v234 = vld [vmem:[%s204 + $0x3c] sm:$0xf]
      %v235 = vld [vmem:[%s1] sm:$0xf]
      %v236 = vld [vmem:[%s1 + $0x4] sm:$0xf]
      %v237 = vld [vmem:[%s1 + $0x8] sm:$0xf]
      %v238 = vld [vmem:[%s1 + $0xc] sm:$0xf]
      %v239 = vld [vmem:[%s1 + $0x10] sm:$0x3]
      %v256 = vunpack.c.l.b16 %v219
      %v257 = vunpack.c.l.b16 %v220
      %v258 = vunpack.c.l.b16 %v221
      %v259 = vunpack.c.l.b16 %v222
      %v260 = vunpack.c.l.b16 %v223
      %v261 = vunpack.c.l.b16 %v224
      %v262 = vunpack.c.l.b16 %v225
      %v263 = vunpack.c.l.b16 %v226
      %v264 = vunpack.c.l.b16 %v227
      %v265 = vunpack.c.l.b16 %v228
      %v266 = vunpack.c.l.b16 %v229
      %v267 = vunpack.c.l.b16 %v230
      %v268 = vunpack.c.l.b16 %v231
      %v269 = vunpack.c.l.b16 %v232
      %v270 = vunpack.c.l.b16 %v233
      %v271 = vunpack.c.l.b16 %v234
      %v272 = vpack.c.b16 %v257, %v256
      %v273 = vpack.c.b16 %v259, %v258
      %v274 = vpack.c.b16 %v261, %v260
      %v275 = vpack.c.b16 %v263, %v262
      %v276 = vpack.c.b16 %v265, %v264
      %v277 = vpack.c.b16 %v267, %v266
      %v278 = vpack.c.b16 %v269, %v268
      %v279 = vpack.c.b16 %v271, %v270
      %v285 = vunpack.c.l.b16 %v235
      %v286 = vunpack.c.l.b16 %v236
      %v287 = vunpack.c.l.b16 %v237
      %v288 = vunpack.c.l.b16 %v238
      %v289 = vunpack.c.l.b16 %v239
      %v290 = vpack.c.b16 %v286, %v285
      %v291 = vpack.c.b16 %v288, %v287
      %v292 = vpack.c.b16 %v289, %v289
      %vm295 = vcmask 293888
      %v297 = vsel %vm295, %v272, 0
      %v300 = vsel %vm295, %v273, 0
      %v303 = vsel %vm295, %v274, 0
      %v306 = vsel %vm295, %v275, 0
      %v309 = vsel %vm295, %v276, 0
      %v312 = vsel %vm295, %v277, 0
      %v315 = vsel %vm295, %v278, 0
      %v318 = vsel %vm295, %v279, 0
      %vm320 = vcmask 1041408
      %v322 = vsel %vm320, %v292, 0
      %324 = vmatpush.bf16.msra.mxu0 0
      %325 = vmatpush.bf16.msra.mxu0 0
      %326 = vmatpush.bf16.msra.mxu0 0
      %327 = vmatpush.bf16.msra.mxu0 0
      %328 = vmatpush.bf16.msra.mxu0 0
      %329 = vmatpush.bf16.msra.mxu0 %v322
      %330 = vmatpush.bf16.msra.mxu0 %v291
      %331 = vmatpush.bf16.msra.mxu0 %v290
      %332 = vmatmul.bf16.gmra.mxu0 %v297
      %v333 = vpop.f32.mrf.mxu0
      %v334 = vadd.f32 0.0, %v333
      %v335 = vpop.f32.mrf.mxu0
      %v336 = vadd.f32 0.0, %v335
      %337 = vmatmul.bf16.gmra.mxu0 %v300
      %v338 = vpop.f32.mrf.mxu0
      %v339 = vadd.f32 0.0, %v338
      %v340 = vpop.f32.mrf.mxu0
      %v341 = vadd.f32 0.0, %v340
      %342 = vmatmul.bf16.gmra.mxu0 %v303
      %v343 = vpop.f32.mrf.mxu0
      %v344 = vadd.f32 0.0, %v343
      %v345 = vpop.f32.mrf.mxu0
      %v346 = vadd.f32 0.0, %v345
      %347 = vmatmul.bf16.gmra.mxu0 %v306
      %v348 = vpop.f32.mrf.mxu0
      %v349 = vadd.f32 0.0, %v348
      %v350 = vpop.f32.mrf.mxu0
      %v351 = vadd.f32 0.0, %v350
      %352 = vmatmul.bf16.gmra.mxu0 %v309
      %v353 = vpop.f32.mrf.mxu0
      %v354 = vadd.f32 0.0, %v353
      %v355 = vpop.f32.mrf.mxu0
      %v356 = vadd.f32 0.0, %v355
      %357 = vmatmul.bf16.gmra.mxu0 %v312
      %v358 = vpop.f32.mrf.mxu0
      %v359 = vadd.f32 0.0, %v358
      %v360 = vpop.f32.mrf.mxu0
      %v361 = vadd.f32 0.0, %v360
      %362 = vmatmul.bf16.gmra.mxu0 %v315
      %v363 = vpop.f32.mrf.mxu0
      %v364 = vadd.f32 0.0, %v363
      %v365 = vpop.f32.mrf.mxu0
      %v366 = vadd.f32 0.0, %v365
      %367 = vmatmul.bf16.gmra.mxu0 %v318
      %v368 = vpop.f32.mrf.mxu0
      %v369 = vadd.f32 0.0, %v368
      %v370 = vpop.f32.mrf.mxu0
      %v371 = vadd.f32 0.0, %v370
      %372 = vdwg.mxu0
      %373 = vst [vmem:[%s210] sm:$0xff] %v334
      %374 = vst [vmem:[%s210 + $0x8] sm:$0xff] %v336
      %375 = vst [vmem:[%s210 + $0x10] sm:$0xff] %v339
      %376 = vst [vmem:[%s210 + $0x18] sm:$0xff] %v341
      %377 = vst [vmem:[%s210 + $0x20] sm:$0xff] %v344
      %378 = vst [vmem:[%s210 + $0x28] sm:$0xff] %v346
      %379 = vst [vmem:[%s210 + $0x30] sm:$0xff] %v349
      %380 = vst [vmem:[%s210 + $0x38] sm:$0xff] %v351
      %381 = vst [vmem:[%s210 + $0x40] sm:$0xff] %v354
      %382 = vst [vmem:[%s210 + $0x48] sm:$0xff] %v356
      %383 = vst [vmem:[%s210 + $0x50] sm:$0xff] %v359
      %384 = vst [vmem:[%s210 + $0x58] sm:$0xff] %v361
      %385 = vst [vmem:[%s210 + $0x60] sm:$0xff] %v364
      %386 = vst [vmem:[%s210 + $0x68] sm:$0xff] %v366
      %387 = vst [vmem:[%s210 + $0x70] sm:$0xff] %v369
      %388 = vst [vmem:[%s210 + $0x78] sm:$0xff] %v371
      %v389 = vadd.f32 %v334, %v336
      %v390 = vadd.f32 %v389, %v339
      %v391 = vadd.f32 %v390, %v341
      %v392 = vadd.f32 %v391, %v344
      %v393 = vadd.f32 %v392, %v346
      %v394 = vadd.f32 %v393, %v349
      %v395 = vadd.f32 %v394, %v351
      %v396 = vadd.f32 %v395, %v354
      %v397 = vadd.f32 %v396, %v356
      %v398 = vadd.f32 %v397, %v359
      %v399 = vadd.f32 %v398, %v361
      %v400 = vadd.f32 %v399, %v364
      %v401 = vadd.f32 %v400, %v366
      %v402 = vadd.f32 %v401, %v369
      %v403 = vadd.f32 %v402, %v371
      %v404 = vrot.slane %v403, 4
      %v405 = vadd.f32 %v403, %v404
      %v406 = vrot.slane %v405, 2
      %v407 = vadd.f32 %v405, %v406
      %v408 = vrot.slane %v407, 1
      %v409 = vadd.f32 %v407, %v408
      %v410 = vmul.f32 %v334, %v334
      %v411 = vmul.f32 %v336, %v336
      %v412 = vmul.f32 %v339, %v339
      %v413 = vmul.f32 %v341, %v341
      %v414 = vmul.f32 %v344, %v344
      %v415 = vmul.f32 %v346, %v346
      %v416 = vmul.f32 %v349, %v349
      %v417 = vmul.f32 %v351, %v351
      %v418 = vmul.f32 %v354, %v354
      %v419 = vmul.f32 %v356, %v356
      %v420 = vmul.f32 %v359, %v359
      %v421 = vmul.f32 %v361, %v361
      %v422 = vmul.f32 %v364, %v364
      %v423 = vmul.f32 %v366, %v366
      %v424 = vmul.f32 %v369, %v369
      %v425 = vmul.f32 %v371, %v371
      %v426 = vadd.f32 %v410, %v411
      %v427 = vadd.f32 %v426, %v412
      %v428 = vadd.f32 %v427, %v413
      %v429 = vadd.f32 %v428, %v414
      %v430 = vadd.f32 %v429, %v415
      %v431 = vadd.f32 %v430, %v416
      %v432 = vadd.f32 %v431, %v417
      %v433 = vadd.f32 %v432, %v418
      %v434 = vadd.f32 %v433, %v419
      %v435 = vadd.f32 %v434, %v420
      %v436 = vadd.f32 %v435, %v421
      %v437 = vadd.f32 %v436, %v422
      %v438 = vadd.f32 %v437, %v423
      %v439 = vadd.f32 %v438, %v424
      %v440 = vadd.f32 %v439, %v425
      %v441 = vrot.slane %v440, 4
      %v442 = vadd.f32 %v440, %v441
      %v443 = vrot.slane %v442, 2
      %v444 = vadd.f32 %v442, %v443
      %v445 = vrot.slane %v444, 1
      %v446 = vadd.f32 %v444, %v445
      %447 = vst [vmem:[%s214] sm:$0x1] %v409
      %448 = vst [vmem:[%s217] sm:$0x1] %v446
      %s449 = smul.u32 16, %s16
      %p450 = scmp.lt.s32.totalorder %s449, 63
      %s451 = scalar_select %p450, %s449, 63
      %s452 = smul.addr %s451, 8
      %s453 = scalar_lea.vmem %s2, %s452
      %p454 = scmp.lt.s32.totalorder %s16, 3
      %s455 = scalar_select %p454, %s16, 3
      %s456 = scalar_lea.vmem %s3, %s455
      %p457 = scmp.lt.s32.totalorder %s16, 3
      %s458 = scalar_select %p457, %s16, 3
      %s459 = scalar_lea.vmem %s4, %s458
      // Predicated region
      $region29: #{conv_block_forward.2} parent=27 // pred_check
        %p460 = pneg %p81
      $region30: #{conv_block_forward.2} parent=27 // pred_check_branch
        %462 = sbr.rel (%p460) target = $region32
      $region31: #{conv_block_forward.2} parent=27 // pred_region
        %s463 = smul.u32 16, %s16
      $region32: #{conv_block_forward.2} parent=27 // pred_fallthru
        _
      // Predicated region
      $region33: #{conv_block_forward.2} parent=27 // pred_check
        %p464 = pneg %p107
      $region34: #{conv_block_forward.2} parent=27 // pred_check_branch
        %466 = sbr.rel (%p464) target = $region36
      $region35: #{conv_block_forward.2} parent=27 // pred_region
        _
      $region36: #{conv_block_forward.2} parent=27 // pred_fallthru
        _
      // Predicated region
      $region37: #{conv_block_forward.2} parent=27 // pred_check
        %p467 = pneg %p133
      $region38: #{conv_block_forward.2} parent=27 // pred_check_branch
        %469 = sbr.rel (%p467) target = $region40
      $region39: #{conv_block_forward.2} parent=27 // pred_region
        _
      $region40: #{conv_block_forward.2} parent=27 // pred_fallthru
        _
    $region28: #{conv_block_forward.2} parent=5 // pred_fallthru
      _
    %p470 = scmp.le.s32.totalorder 2, %s11
    // Predicated region
    $region41: #{conv_block_forward.2} parent=5 // pred_check
      %p471 = pneg %p470
    $region42: #{conv_block_forward.2} parent=5 // pred_check_branch
      %473 = sbr.rel (%p471) target = $region44
    $region43: #{conv_block_forward.2} parent=5 // pred_region
      %s474 = ssub.s32 %s11, 2
      // Predicated region
      $region45: #{conv_block_forward.2} parent=43 // pred_check
        %p475 = pneg %p87
      $region46: #{conv_block_forward.2} parent=43 // pred_check_branch
        %477 = sbr.rel (%p475) target = $region48
      $region47: #{conv_block_forward.2} parent=43 // pred_region
        %s478 = smul.u32 16, %s17
        %p479 = scmp.lt.s32.totalorder %s478, 63
        %s480 = scalar_select %p479, %s478, 63
        %s481 = smul.addr %s480, 8
        %s482 = scalar_lea.vmem %s2, %s481
      $region48: #{conv_block_forward.2} parent=43 // pred_fallthru
        _
      // Predicated region
      $region49: #{conv_block_forward.2} parent=43 // pred_check
        %p483 = pneg %p113
      $region50: #{conv_block_forward.2} parent=43 // pred_check_branch
        %485 = sbr.rel (%p483) target = $region52
      $region51: #{conv_block_forward.2} parent=43 // pred_region
        %p486 = scmp.lt.s32.totalorder %s17, 3
        %s487 = scalar_select %p486, %s17, 3
        %s488 = scalar_lea.vmem %s3, %s487
      $region52: #{conv_block_forward.2} parent=43 // pred_fallthru
        _
      // Predicated region
      $region53: #{conv_block_forward.2} parent=43 // pred_check
        %p489 = pneg %p139
      $region54: #{conv_block_forward.2} parent=43 // pred_check_branch
        %491 = sbr.rel (%p489) target = $region56
      $region55: #{conv_block_forward.2} parent=43 // pred_region
        %p492 = scmp.lt.s32.totalorder %s17, 3
        %s493 = scalar_select %p492, %s17, 3
        %s494 = scalar_lea.vmem %s4, %s493
      $region56: #{conv_block_forward.2} parent=43 // pred_fallthru
        _
    $region44: #{conv_block_forward.2} parent=5 // pred_fallthru
      _
  $region6: #{conv_block_forward.2} parent=0 // loop_footer
    %s15 = sadd.s32 1, %s11
  $region7: #{conv_block_forward.2} parent=0 // loop_footer_branch
    %10 = sbr.rel target = $region3
  $region8: #{conv_block_forward.2} parent=0 // loop_exit
    _

</llo_original>
